<compile_context>
chip_gen: v6e
topology: v6e:2x2x1
jax: 0.10.0
libtpu: 0.0.40
codegen_flags: <defaults>
</compile_context>

<pallas_src>
import functools

import jax
import jax.numpy as jnp
from jax.experimental import pallas as pl
from jax.experimental.pallas import tpu as pltpu


def _round_up(x, m):
    return ((x + m - 1) // m) * m


def _adaptive_act_kernel(a_ref, x_ref, o_ref, *, scaling):
    # a_ref: (1,) learnable scalar in SMEM (scalar prefetch).
    # x_ref / o_ref: (tm, tn) tile in VMEM.
    s = jnp.float32(scaling) * a_ref[0]                  # scalar ALU, free
    y = jnp.tanh(s * x_ref[...].astype(jnp.float32))     # EUP; compute in f32
    o_ref[...] = y.astype(o_ref.dtype)


def adaptive_activation(x, a, *, scaling=1.0, tm=None, tn=None):
    """tanh(scaling * a * x), elementwise, as a Pallas TPU kernel.

    Works for any input shape / float dtype; internally flattens to 2-D,
    pads up to the chosen tile, and slices the padding back off.
    """
    orig_shape = x.shape
    x2 = x.reshape(1, -1) if x.ndim == 1 else x.reshape(-1, x.shape[-1])
    M, N = x2.shape
    itemsize = jnp.dtype(x2.dtype).itemsize
    sub = max(8, 32 // itemsize)       # min sublane tile: 8 f32, 16 bf16, 32 int8

    # --- lane (last-dim) tile: keep output lane-dense (multiple of 128) ------
    if tn is None:
        tn = _round_up(N, 128) if N <= 4096 else 2048
    tn = _round_up(tn, 128)
    Np = _round_up(N, tn)

    # --- sublane (row) tile: ~2 MiB per block, dtype-aware, >=2 grid steps ---
    if tm is None:
        target_rows = max(sub, (2 * 1024 * 1024) // max(1, tn * itemsize))
        tm = min(1024, _round_up(target_rows, sub))
        tm = min(tm, _round_up(M, sub))
        if Np // tn == 1:
            # keep >= 2 parallel grid steps (v7x has 2 TensorCores) when M allows
            while tm > sub and _round_up(M, tm) // tm < 2:
                tm = max(sub, _round_up(tm // 2, sub))
    tm = _round_up(tm, sub)
    Mp = _round_up(M, tm)

    if (Mp, Np) != (M, N):
        x2 = jnp.pad(x2, ((0, Mp - M), (0, Np - N)))

    # Raise scoped VMEM only if the double-buffered blocks actually need it
    # (cap at 64 MiB so it stays valid on v7x's smaller VMEM).
    block_bytes = tm * tn * itemsize
    needed = 4 * block_bytes + (1 << 20)          # 2x input + 2x output buffers
    vmem_limit = None
    if needed > 32 * 1024 * 1024:
        vmem_limit = min(64 * 1024 * 1024, _round_up(needed, 1 << 20))

    a_arr = jnp.asarray(a, dtype=jnp.float32).reshape(1)
    kernel = functools.partial(_adaptive_act_kernel, scaling=float(scaling))

    out = pl.pallas_call(
        kernel,
        out_shape=jax.ShapeDtypeStruct((Mp, Np), x2.dtype),
        grid_spec=pltpu.PrefetchScalarGridSpec(
            num_scalar_prefetch=1,
            grid=(Mp // tm, Np // tn),
            in_specs=[pl.BlockSpec((tm, tn), lambda i, j, a_s: (i, j))],
            out_specs=pl.BlockSpec((tm, tn), lambda i, j, a_s: (i, j)),
        ),
        compiler_params=pltpu.CompilerParams(
            dimension_semantics=("parallel", "parallel"),
            vmem_limit_bytes=vmem_limit),
    )(a_arr, x2)

    return out[:M, :N].reshape(orig_shape)
    # TODO(synk): on v7x, prefer fusing this tanh as an epilogue of the
    # producing matmul kernel to avoid the extra HBM round-trip entirely.


if __name__ == "__main__":
    key = jax.random.PRNGKey(0)
    kx, ka, kx2 = jax.random.split(key, 3)

    # Module defaults: inital_a = 1.0 (perturbed slightly so the multiply is
    # exercised); scaling is a fixed float.
    inital_a = 1.0
    a = jnp.float32(inital_a) + 0.1 * jax.random.normal(ka, (), dtype=jnp.float32)
    scaling = 2.0

    # Small PINN-like hidden activation: batch=16, hidden=128, f32.
    x = jax.random.normal(kx, (16, 128), dtype=jnp.float32)
    out = jax.block_until_ready(adaptive_activation(x, a, scaling=scaling))
    ref = jnp.tanh(scaling * a * x)
    assert out.shape == x.shape and out.dtype == x.dtype
    assert jnp.allclose(out, ref, atol=1e-6, rtol=1e-6)

    # Ragged + bf16 path (exercises padding and the dtype-aware sublane tile).
    xb = jax.random.normal(kx2, (7, 96), dtype=jnp.bfloat16)
    outb = jax.block_until_ready(adaptive_activation(xb, a, scaling=scaling))
    refb = jnp.tanh(scaling * a * xb.astype(jnp.float32)).astype(jnp.bfloat16)
    assert outb.shape == xb.shape and outb.dtype == xb.dtype
    assert jnp.allclose(outb.astype(jnp.float32), refb.astype(jnp.float32),
                        atol=2e-2, rtol=2e-2)

    print("KERNEL_OK")
</pallas_src>

<mosaic_0001>
module attributes {stable_mosaic.version = 11 : i64} {
  func.func @_adaptive_act_kernel(%arg0: i32, %arg1: i32, %arg2: memref<1xf32, #tpu.memory_space<smem>>, %arg3: memref<8x128xf32, #tpu.memory_space<vmem>>, %arg4: memref<8x128xf32, #tpu.memory_space<vmem>>) attributes {dimension_semantics = [#tpu.dimension_semantics<parallel>, #tpu.dimension_semantics<parallel>], iteration_bounds = array<i64: 2, 1>, scalar_prefetch = 1 : i64, scratch_operands = 0 : i64, tpu.core_type = #tpu.core_type<tc>, window_params = [{transform_indices = @transform_0, window_bounds = array<i64: 8, 128>}, {transform_indices = @transform_1, window_bounds = array<i64: 8, 128>}]} {
    %c0 = arith.constant 0 : index
    %0 = memref.load %arg2[%c0] : memref<1xf32, #tpu.memory_space<smem>>
    %cst = arith.constant 2.000000e+00 : f32
    %1 = arith.mulf %cst, %0 : f32
    %c0_0 = arith.constant 0 : index
    %c0_1 = arith.constant 0 : index
    %2 = vector.load %arg3[%c0_0, %c0_1] : memref<8x128xf32, #tpu.memory_space<vmem>>, vector<8x128xf32>
    %3 = vector.broadcast %1 : f32 to vector<8x128xf32>
    %4 = arith.mulf %3, %2 : vector<8x128xf32>
    %5 = math.tanh %4 : vector<8x128xf32>
    %c0_2 = arith.constant 0 : index
    %c0_3 = arith.constant 0 : index
    %6 = vector.load %arg4[%c0_2, %c0_3] : memref<8x128xf32, #tpu.memory_space<vmem>>, vector<8x128xf32>
    tpu.vector_store %arg4[%c0_2, %c0_3], %5 {strides = array<i32>} : memref<8x128xf32, #tpu.memory_space<vmem>>, vector<8x128xf32>,
    return
  }
  func.func @transform_0(%arg0: i32, %arg1: i32, %arg2: memref<1xf32, #tpu.memory_space<smem>>) -> (i32, i32) {
    %c0_i32 = arith.constant 0 : i32
    return %arg0, %arg1 : i32, i32
  }
  func.func @transform_1(%arg0: i32, %arg1: i32, %arg2: memref<1xf32, #tpu.memory_space<smem>>) -> (i32, i32) {
    %c0_i32 = arith.constant 0 : i32
    return %arg0, %arg1 : i32, i32
  }
}

</mosaic_0001>

<llo_original>
// kernel: tpu_custom_call.1
$region0: #{tpu_custom_call.1}
  #allocation0 [shape = 'u32[]', space=smem, size = 0x4, offset = 0x4, fixed_abs, tag = 'smem constant byte address 0x4 - core index']
  #allocation1 [shape = 'u32[144,128]{1,0:T(1,128)}', space=vmem, size = 0x12000, scoped, tag = 'internal scratch']
  #allocation2 [shape = 's32[1]{0}', space=sflag, size = 0x4, scoped, tag = 'scoped memory for tpu_custom_call.1']
  #allocation3 [shape = 'f32[1]{0:T(128)S(6)}', space=smem, size = 0x200, scoped, tag = 'prefetched SMEM operand 0']
  %s0 = inlined_call_operand.<no memory space> [shape: f32[1], index: 0, kind: input, shape index: {}]
  %s1 = inlined_call_operand.hbm [shape: f32[16,128], index: 1, kind: input, shape index: {}]
  %s2 = inlined_call_operand.hbm [shape: f32[16,128], index: 2, kind: output, shape index: {}]
  %s3 = sld [smem:[#allocation0]]
  $region41: #{tpu_custom_call.1} parent=0
    _
  %s5 = ssub.s32 1, %s3
  %s6 = scalar_select 0, %s5, %s3
  %7 = sst [smem:[#allocation3]] %s0
  $region1: #{tpu_custom_call.1} parent=0
    #allocation4 [shape = 'u8[8192]{0}', space=vmem, size = 0x2000, scoped, tag = 'input window, operand 1']
    #allocation5 [shape = 's32[2]{0}', space=sflag, size = 0x8, scoped, tag = 'scoped memory for tpu_custom_call.1']
    #allocation6 [shape = 's32[2]{0}', space=sflag, size = 0x8, scoped, tag = 'scoped memory for tpu_custom_call.1']
    #allocation7 [shape = 'u8[8192]{0}', space=vmem, size = 0x2000, scoped, tag = 'output window, operand 0']
    %8 = vsyncpa [#allocation5], 0
    %s9 = scalar_lea.sflag [#allocation5], 1
    %10 = vsyncpa %s9, 0
    %11 = vsyncpa [#allocation6], 0
    %s12 = scalar_lea.sflag [#allocation6], 1
    %13 = vsyncpa %s12, 0
    loop: start=0, step=1, limit=4
    $region2: #{tpu_custom_call.1} parent=1 // loop_pre_header
      _
    $region3: #{tpu_custom_call.1} parent=1 // loop_header
      %s15 = sphi 0, %s19
      %p16 = scmp.ge.s32.totalorder %s15, 4
      %s22 = sphi 0, %s34
      %s23 = sphi 0, %s30
      %s24 = sphi 0, %s22
      %s25 = sphi 0, %s23
      %s26 = sphi 0, %s24
      %s27 = sphi 0, %s25
      %s39 = sphi 0, %s41
      %s42 = sphi 0, %s39
      %s43 = sphi 0, %s42
      %s59 = sphi 0, %s43
      %s67 = sphi 0, %s69
      %s70 = sphi 0, %s67
      %s71 = sphi 0, %s70
      %s87 = sphi 0, %s71
    $region4: #{tpu_custom_call.1} parent=1 // loop_header_branch
      %18 = sbr.rel (%p16) target = $region8
    $region5: #{tpu_custom_call.1} parent=1 // loop_body
      %s20 = ssub.s32 %s15, 1
      %s21 = ssub.s32 %s15, 2
      %s28 = sadd.s32 1, %s23
      %p29 = scmp.ge.s32.totalorder %s28, 1
      %s30 = scalar_select %p29, 0, %s28
      %s31 = sadd.s32 1, %s22
      %s32 = scalar_select %p29, %s31, %s22
      %p33 = scmp.ge.s32.totalorder %s32, 2
      %s34 = scalar_select %p33, 0, %s32
      %s35 = ssub.s32 %s22, %s34
      %s36 = ssub.s32 %s23, %s30
      %s37 = sor.u32 %s35, %s36
      %p38 = scmp.eq.s32.totalorder %s37, 0
      %s40 = sadd.s32 %s39, 1
      %s41 = scalar_select %p38, %s39, %s40
      %p44 = pneg %p38
      %p45 = scmp.eq.s32.totalorder %s15, 1
      %p46 = por %p44, %p45
      %p47 = scmp.ne.s32.totalorder %s39, %s42
      %p48 = scmp.eq.s32.totalorder %s15, 0
      %p49 = por %p47, %p48
      %p50 = scmp.ne.s32.totalorder %s39, %s42
      %p51 = scmp.eq.s32.totalorder %s20, 1
      %p52 = por %p50, %p51
      %p53 = scmp.ne.s32.totalorder %s42, %s43
      %p54 = scmp.eq.s32.totalorder %s20, 0
      %p55 = por %p53, %p54
      %p56 = scmp.ne.s32.totalorder %s42, %s43
      %p57 = scmp.eq.s32.totalorder %s21, 1
      %p58 = por %p56, %p57
      %p60 = scmp.ne.s32.totalorder %s43, %s59
      %p61 = scmp.eq.s32.totalorder %s21, 0
      %p62 = por %p60, %p61
      %s63 = ssub.s32 %s22, %s34
      %s64 = ssub.s32 %s23, %s30
      %s65 = sor.u32 %s63, %s64
      %p66 = scmp.eq.s32.totalorder %s65, 0
      %s68 = sadd.s32 %s67, 1
      %s69 = scalar_select %p66, %s67, %s68
      %p72 = pneg %p66
      %p73 = scmp.eq.s32.totalorder %s15, 1
      %p74 = por %p72, %p73
      %p75 = scmp.ne.s32.totalorder %s67, %s70
      %p76 = scmp.eq.s32.totalorder %s15, 0
      %p77 = por %p75, %p76
      %p78 = scmp.ne.s32.totalorder %s67, %s70
      %p79 = scmp.eq.s32.totalorder %s20, 1
      %p80 = por %p78, %p79
      %p81 = scmp.ne.s32.totalorder %s70, %s71
      %p82 = scmp.eq.s32.totalorder %s20, 0
      %p83 = por %p81, %p82
      %p84 = scmp.ne.s32.totalorder %s70, %s71
      %p85 = scmp.eq.s32.totalorder %s21, 1
      %p86 = por %p84, %p85
      %p88 = scmp.ne.s32.totalorder %s71, %s87
      %p89 = scmp.eq.s32.totalorder %s21, 0
      %p90 = por %p88, %p89
      %p91 = scmp.le.s32.totalorder 1, %s15
      %p92 = scmp.lt.s32.totalorder %s15, 3
      %p93 = pnand %p91, %p92
      %p94 = pneg %p93
      // Predicated region
      $region9: #{tpu_custom_call.1} parent=5 // pred_check
        _
      $region10: #{tpu_custom_call.1} parent=5 // pred_check_branch
        %96 = sbr.rel (%p93) target = $region12
      $region11: #{tpu_custom_call.1} parent=5 // pred_region
        %s97 = ssub.s32 %s15, 1
      $region12: #{tpu_custom_call.1} parent=5 // pred_fallthru
        _
      %p98 = scmp.lt.s32.totalorder %s15, 2
      // Predicated region
      $region13: #{tpu_custom_call.1} parent=5 // pred_check
        %p99 = pneg %p98
      $region14: #{tpu_custom_call.1} parent=5 // pred_check_branch
        %101 = sbr.rel (%p99) target = $region16
      $region15: #{tpu_custom_call.1} parent=5 // pred_region
        // Predicated region
        $region17: #{tpu_custom_call.1} parent=15 // pred_check
          %p102 = pneg %p49
        $region18: #{tpu_custom_call.1} parent=15 // pred_check_branch
          %104 = sbr.rel (%p102) target = $region20
        $region19: #{tpu_custom_call.1} parent=15 // pred_region
          %s105 = sand.u32 %s39, 1
          %s106 = scalar_lea.sflag [#allocation5], %s105
          %s107 = sand.u32 %s39, 1
          %s108 = smul.addr %s107, 8
          %s109 = scalar_lea.vmem [#allocation4], %s108
          %s111 = ssub.s32 128, 128
          %112 = vsyncadd %s106, %s111
          %s113 = sadd.s32 %s23, %s22
          %s114 = smul.addr %s113, 128
          %s115 = scalar_lea.hbm %s1, %s114
          %s117 = sshll.u32 %s109, 4
          %s118 = int_to_ptr.vmem [resolvable:$true] %s117
          %120 = dma.hbm_to_vmem [thread:$0]  %s115, 128, %s118, %s106
        $region20: #{tpu_custom_call.1} parent=15 // pred_fallthru
          _
      $region16: #{tpu_custom_call.1} parent=5 // pred_fallthru
        _
      %p121 = scmp.le.s32.totalorder 1, %s15
      %p122 = scmp.lt.s32.totalorder %s15, 3
      %p123 = pnand %p121, %p122
      %p124 = pneg %p123
      // Predicated region
      $region21: #{tpu_custom_call.1} parent=5 // pred_check
        _
      $region22: #{tpu_custom_call.1} parent=5 // pred_check_branch
        %126 = sbr.rel (%p123) target = $region24
      $region23: #{tpu_custom_call.1} parent=5 // pred_region
        %s127 = ssub.s32 %s15, 1
        %s128 = sand.u32 %s42, 1
        %s129 = scalar_lea.sflag [#allocation5], %s128
        %s130 = sand.u32 %s42, 1
        %s131 = smul.addr %s130, 8
        %s132 = scalar_lea.vmem [#allocation4], %s131
        // Predicated region
        $region25: #{tpu_custom_call.1} parent=23 // pred_check
          %p133 = pneg %p55
        $region26: #{tpu_custom_call.1} parent=23 // pred_check_branch
          %135 = sbr.rel (%p133) target = $region28
        $region27: #{tpu_custom_call.1} parent=23 // pred_region
          %136 = dma.done %s129, 128
        $region28: #{tpu_custom_call.1} parent=23 // pred_fallthru
          _
        %s137 = sand.u32 %s42, 1
        %s138 = scalar_lea.sflag [#allocation5], %s137
        %s139 = sand.u32 %s42, 1
        %s140 = smul.addr %s139, 8
        %s141 = scalar_lea.vmem [#allocation4], %s140
        %p142 = pneg %p55
        %p143 = pneg %p52
        %p144 = pneg %p83
        %p145 = pneg %p80
        %s146 = sand.u32 %s70, 1
        %s147 = scalar_lea.sflag [#allocation6], %s146
        %s148 = sand.u32 %s70, 1
        %s149 = smul.addr %s148, 8
        %s150 = scalar_lea.vmem [#allocation7], %s149
        %s151 = sld [smem:[#allocation3]]
        %s152 = smul.f32 %s151, 2.0
        %v153 = vld [vmem:[%s132] sm:$0xff]
        %v154 = vstv %s152
        %v155 = vmul.f32 %v154, %v153
        %v156 = vtanh.pop %v155
        %157 = vst [vmem:[%s150] sm:$0xff] %v156
        %s158 = sand.u32 %s70, 1
        %s159 = scalar_lea.sflag [#allocation6], %s158
        %s160 = sand.u32 %s70, 1
        %s161 = smul.addr %s160, 8
        %s162 = scalar_lea.vmem [#allocation7], %s161
        // Predicated region
        $region29: #{tpu_custom_call.1} parent=23 // pred_check
          %p163 = pneg %p80
        $region30: #{tpu_custom_call.1} parent=23 // pred_check_branch
          %165 = sbr.rel (%p163) target = $region32
        $region31: #{tpu_custom_call.1} parent=23 // pred_region
          %s167 = ssub.s32 128, 128
          %168 = vsyncadd %s159, %s167
          %s169 = sadd.s32 %s25, %s24
          %s170 = smul.addr %s169, 128
          %s171 = scalar_lea.hbm %s2, %s170
          %s173 = sshll.u32 %s162, 4
          %s174 = int_to_ptr.vmem [resolvable:$true] %s173
          %176 = dma.vmem_to_hbm [thread:$0]  %s174, 128, %s171, %s159
        $region32: #{tpu_custom_call.1} parent=23 // pred_fallthru
          _
      $region24: #{tpu_custom_call.1} parent=5 // pred_fallthru
        _
      %p177 = scmp.le.s32.totalorder 2, %s15
      // Predicated region
      $region33: #{tpu_custom_call.1} parent=5 // pred_check
        %p178 = pneg %p177
      $region34: #{tpu_custom_call.1} parent=5 // pred_check_branch
        %180 = sbr.rel (%p178) target = $region36
      $region35: #{tpu_custom_call.1} parent=5 // pred_region
        %s181 = ssub.s32 %s15, 2
        // Predicated region
        $region37: #{tpu_custom_call.1} parent=35 // pred_check
          %p182 = pneg %p86
        $region38: #{tpu_custom_call.1} parent=35 // pred_check_branch
          %184 = sbr.rel (%p182) target = $region40
        $region39: #{tpu_custom_call.1} parent=35 // pred_region
          %s185 = sand.u32 %s71, 1
          %s186 = scalar_lea.sflag [#allocation6], %s185
          %s187 = sand.u32 %s71, 1
          %s188 = smul.addr %s187, 8
          %s189 = scalar_lea.vmem [#allocation7], %s188
          %190 = dma.done %s186, 128
        $region40: #{tpu_custom_call.1} parent=35 // pred_fallthru
          _
      $region36: #{tpu_custom_call.1} parent=5 // pred_fallthru
        _
    $region6: #{tpu_custom_call.1} parent=1 // loop_footer
      %s19 = sadd.s32 1, %s15
    $region7: #{tpu_custom_call.1} parent=1 // loop_footer_branch
      %14 = sbr.rel target = $region3
    $region8: #{tpu_custom_call.1} parent=1 // loop_exit
      _
    %191 = vsyncpa [#allocation5], 1
    %s192 = scalar_lea.sflag [#allocation5], 1
    %193 = vsyncpa %s192, 1
    %194 = vsyncpa [#allocation6], 1
    %s195 = scalar_lea.sflag [#allocation6], 1
    %196 = vsyncpa %s195, 1

</llo_original>
